<compile_context>
chip_gen: v7x
topology: tpu7x:2x2x1
jax: 0.10.0
libtpu: 0.0.40
codegen_flags: <defaults>
</compile_context>

<pallas_src>
import functools

import jax
import jax.numpy as jnp
from jax import lax
from jax.experimental import pallas as pl
from jax.experimental.pallas import tpu as pltpu

NUM_CLASSES = 19
LOSS_WEIGHT = 0.5
PAIR_EPS = 1e-6      # F.pairwise_distance eps (added elementwise to the difference)
MASK_EPS = 1e-6      # denominator eps in the prototype average

HW_CHUNK_TARGET = 32768        # lanes per chunk; sized for v7x (64 MiB VMEM)
VMEM_LIMIT_BYTES = 40 * 1024 * 1024   # explicit scoped-VMEM request, safe on v5e/v6e/v7x


def _interclass_kernel(gt_ref, s_ref, t_ref, out_ref,
                       vsum_s_ref, vsum_t_ref, cnt_ref, *, num_classes):
    """Grid = (batch, hw_chunks); hw is the inner 'arbitrary' reduction axis.

    gt_ref : (1, 1, hw) int32   resized ground-truth labels (chunk)
    s_ref  : (1, C, hw) f32/bf16 student features (chunk)
    t_ref  : (1, C, hw) f32/bf16 teacher features (chunk)
    out_ref: (1, 1, 128) f32    per-batch loss, splat across lanes (written on last chunk)
    vsum_* : (K, C) f32 scratch  masked per-class feature sums
    cnt_ref: (K, 1) f32 scratch  per-class pixel counts
    """
    hw_i = pl.program_id(1)
    hw_n = pl.num_programs(1)
    K = num_classes
    C = s_ref.shape[1]
    hw = s_ref.shape[2]

    # ---- init accumulators at the start of each batch element's HW sweep ----
    @pl.when(hw_i == 0)
    def _():
        vsum_s_ref[...] = jnp.zeros_like(vsum_s_ref)
        vsum_t_ref[...] = jnp.zeros_like(vsum_t_ref)
        cnt_ref[...] = jnp.zeros_like(cnt_ref)

    s = s_ref[0]                  # (C, hw)   native dtype
    t = t_ref[0]                  # (C, hw)
    gt = gt_ref[0]                # (1, hw) int32

    # One-hot class mask built on-chip: mask[k, p] = (gt[p] == k). gt broadcasts
    # along sublanes (cheap VPU compare).
    class_ids = lax.broadcasted_iota(jnp.int32, (K, hw), 0)
    onehot = class_ids == gt                                   # (K, hw) bool
    mask_f = onehot.astype(jnp.float32)                        # exact counts in f32
    mask_mm = onehot.astype(s.dtype)                           # 0/1 exact in bf16 too

    # Per-class partial sums over this HW chunk (MXU), accumulated in f32 scratch.
    dn = (((1,), (1,)), ((), ()))                              # contract both HW dims
    cnt_ref[...] += jnp.sum(mask_f, axis=-1, keepdims=True)    # (K, 1)
    vsum_s_ref[...] += lax.dot_general(mask_mm, s, dn,
                                       preferred_element_type=jnp.float32)  # (K, C)
    vsum_t_ref[...] += lax.dot_general(mask_mm, t, dn,
                                       preferred_element_type=jnp.float32)  # (K, C)

    # ---- epilogue: pairwise class-prototype distances, once per batch element ----
    @pl.when(hw_i == hw_n - 1)
    def _():
        inv_cnt = 1.0 / (cnt_ref[...] + MASK_EPS)              # (K, 1), shared S/T
        V_S = vsum_s_ref[...] * inv_cnt                        # (K, C)
        V_T = vsum_t_ref[...] * inv_cnt

        def pairwise_dist(V):
            # F.pairwise_distance(vi, vj, p=2) = sqrt(sum_c (vi_c - vj_c + eps)^2)
            #   = ||vi||^2 + ||vj||^2 - 2 vi.vj + 2*eps*(sum_c vi_c - sum_c vj_c) + C*eps^2
            sq = jnp.sum(V * V, axis=-1, keepdims=True)        # (K, 1)
            rs = jnp.sum(V, axis=-1, keepdims=True)            # (K, 1)
            G = lax.dot_general(V, V, dn, preferred_element_type=jnp.float32)  # (K, K)
            d2 = sq + jnp.transpose(sq) - 2.0 * G
            d2 = d2 + 2.0 * PAIR_EPS * (rs - jnp.transpose(rs)) + C * PAIR_EPS * PAIR_EPS
            return jnp.sqrt(jnp.maximum(d2, 0.0))              # (K, K)

        e_S = pairwise_dist(V_S)
        e_T = pairwise_dist(V_T)
        diff = e_T - e_S

        ii = lax.broadcasted_iota(jnp.int32, (K, K), 0)
        jj = lax.broadcasted_iota(jnp.int32, (K, K), 1)
        tri = (ii < jj).astype(jnp.float32)                    # upper triangle i<j

        per_batch = 0.5 * jnp.sum(tri * diff * diff)           # scalar
        # Lane-dense splat store of the per-batch partial loss.
        out_ref[...] = jnp.broadcast_to(per_batch, out_ref.shape).astype(out_ref.dtype)


def inter_class_loss(preds_S, preds_T, gt, *, num_classes=NUM_CLASSES,
                     loss_weight=LOSS_WEIGHT, hw_chunk_target=HW_CHUNK_TARGET):
    """InterClassLoss forward (distance_type='euclidean', align=None)."""
    assert preds_S.shape[-2:] == preds_T.shape[-2:]
    N, C, H, W = preds_S.shape

    # gt: (N, 1, Hg, Wg) -> bilinear resize to (H, W), align_corners=False, then int()
    gt_f = jax.image.resize(gt.astype(jnp.float32),
                            (gt.shape[0], gt.shape[1], H, W), method="bilinear")
    gt_i = gt_f.astype(jnp.int32)                 # trunc toward zero, like .int()

    HW = H * W
    if HW <= hw_chunk_target:
        hw_chunk, HW_pad = HW, HW                 # single chunk == full spatial dim
    else:
        hw_chunk = hw_chunk_target
        assert hw_chunk % 128 == 0, "hw_chunk_target must be a multiple of 128"
        HW_pad = pl.cdiv(HW, hw_chunk) * hw_chunk

    gt_flat = gt_i.reshape(N, 1, HW)
    s_flat = preds_S.reshape(N, C, HW)            # stream native dtype (no f32 upcast)
    t_flat = preds_T.reshape(N, C, HW)
    if HW_pad != HW:
        pad = HW_pad - HW
        gt_flat = jnp.pad(gt_flat, ((0, 0), (0, 0), (0, pad)), constant_values=-1)
        s_flat = jnp.pad(s_flat, ((0, 0), (0, 0), (0, pad)))
        t_flat = jnp.pad(t_flat, ((0, 0), (0, 0), (0, pad)))

    n_hw = HW_pad // hw_chunk
    kernel = functools.partial(_interclass_kernel, num_classes=num_classes)

    out = pl.pallas_call(
        kernel,
        out_shape=jax.ShapeDtypeStruct((N, 1, 128), jnp.float32),
        grid_spec=pltpu.PrefetchScalarGridSpec(
            num_scalar_prefetch=0,
            grid=(N, n_hw),                        # batch parallel, HW reduction last
            in_specs=[
                pl.BlockSpec((1, 1, hw_chunk), lambda n, h: (n, 0, h)),
                pl.BlockSpec((1, C, hw_chunk), lambda n, h: (n, 0, h)),
                pl.BlockSpec((1, C, hw_chunk), lambda n, h: (n, 0, h)),
            ],
            out_specs=pl.BlockSpec((1, 1, 128), lambda n, h: (n, 0, 0)),
            scratch_shapes=[
                pltpu.VMEM((num_classes, C), jnp.float32),   # masked sums, student
                pltpu.VMEM((num_classes, C), jnp.float32),   # masked sums, teacher
                pltpu.VMEM((num_classes, 1), jnp.float32),   # per-class counts
            ],
        ),
        compiler_params=pltpu.CompilerParams(
            dimension_semantics=("parallel", "arbitrary"),
            vmem_limit_bytes=VMEM_LIMIT_BYTES,
        ),
    )(gt_flat, s_flat, t_flat)

    loss = jnp.sum(out[:, 0, 0]) / N              # .mean() over the batch
    return loss_weight * loss


def _reference_loss(preds_S, preds_T, gt, *, num_classes=NUM_CLASSES,
                    loss_weight=LOSS_WEIGHT):
    """Pure-JAX reference mirroring the PyTorch code (direct eps-in-norm form)."""
    N, C, H, W = preds_S.shape
    gt_f = jax.image.resize(gt.astype(jnp.float32),
                            (gt.shape[0], gt.shape[1], H, W), method="bilinear")
    gt_i = gt_f.astype(jnp.int32)

    def proto(feat, k):
        m = (gt_i == k).astype(jnp.float32)                     # (N,1,H,W)
        num = (m * feat.astype(jnp.float32)).sum(-1).sum(-1)    # (N,C)
        den = m.sum(-1).sum(-1) + MASK_EPS                      # (N,1)
        return num / den

    V_S = jnp.stack([proto(preds_S, k) for k in range(num_classes)], 0)  # (K,N,C)
    V_T = jnp.stack([proto(preds_T, k) for k in range(num_classes)], 0)

    loss = jnp.zeros((N,), jnp.float32)
    for i in range(num_classes):
        for j in range(num_classes):
            if i < j:
                e_S = jnp.sqrt(jnp.sum((V_S[i] - V_S[j] + PAIR_EPS) ** 2, -1))
                e_T = jnp.sqrt(jnp.sum((V_T[i] - V_T[j] + PAIR_EPS) ** 2, -1))
                loss = loss + 0.5 * (e_T - e_S) ** 2
    return loss_weight * loss.mean()


def _init_unused_params(key, c=NUM_CLASSES):
    # Deterministic init mirroring Embed(student_channels, student_channels);
    # unused in the euclidean forward path (kept only to mirror the module __init__).
    k1, k2, k3, k4 = jax.random.split(key, 4)
    return {
        "embed_s": {"w1": jax.random.normal(k1, (c, c, 1, 1)) * 0.02,
                    "w2": jax.random.normal(k2, (c, c, 1, 1)) * 0.02},
        "embed_t": {"w1": jax.random.normal(k3, (c, c, 1, 1)) * 0.02,
                    "w2": jax.random.normal(k4, (c, c, 1, 1)) * 0.02},
        # align is None since student_channels == teacher_channels == 19
    }


if __name__ == "__main__":
    key = jax.random.PRNGKey(0)
    k_s, k_t, k_g, k_p = jax.random.split(key, 4)

    N, C, H, W = 2, NUM_CLASSES, 16, 16
    preds_S = jax.random.normal(k_s, (N, C, H, W), dtype=jnp.float32)
    preds_T = jax.random.normal(k_t, (N, C, H, W), dtype=jnp.float32)

    # Ground-truth labels in [0, num_classes), with a few ignore_label=255 pixels.
    gt = jax.random.randint(k_g, (N, 1, H, W), 0, NUM_CLASSES, dtype=jnp.int32)
    ignore = jax.random.bernoulli(k_p, 0.05, (N, 1, H, W))
    gt = jnp.where(ignore, jnp.int32(255), gt)

    _ = _init_unused_params(key)   # deterministic, unused (see note at top)

    ref = _reference_loss(preds_S, preds_T, gt)

    # Default path: HW (=256) fits in a single chunk.
    loss_single = inter_class_loss(preds_S, preds_T, gt)
    jax.block_until_ready(loss_single)

    # Force multiple HW chunks to exercise the scratch accumulation + epilogue path.
    loss_chunked = inter_class_loss(preds_S, preds_T, gt, hw_chunk_target=128)
    jax.block_until_ready(loss_chunked)

    assert jnp.allclose(loss_single, ref, rtol=1e-4, atol=1e-5), (loss_single, ref)
    assert jnp.allclose(loss_chunked, ref, rtol=1e-4, atol=1e-5), (loss_chunked, ref)

    print("KERNEL_OK")
</pallas_src>

<mosaic_0001>
module attributes {stable_mosaic.version = 11 : i64} {
  func.func @_interclass_kernel(%arg0: i32, %arg1: i32, %arg2: memref<1x1x256xi32, #tpu.memory_space<vmem>>, %arg3: memref<1x19x256xf32, #tpu.memory_space<vmem>>, %arg4: memref<1x19x256xf32, #tpu.memory_space<vmem>>, %arg5: memref<1x1x128xf32, #tpu.memory_space<vmem>>, %arg6: memref<19x19xf32, #tpu.memory_space<vmem>>, %arg7: memref<19x19xf32, #tpu.memory_space<vmem>>, %arg8: memref<19x1xf32, #tpu.memory_space<vmem>>) attributes {dimension_semantics = [#tpu.dimension_semantics<parallel>, #tpu.dimension_semantics<arbitrary>], iteration_bounds = array<i64: 2, 1>, scalar_prefetch = 0 : i64, scratch_operands = 3 : i64, tpu.core_type = #tpu.core_type<tc>, window_params = [{transform_indices = @transform_0, window_bounds = array<i64: 1, 1, 256>}, {transform_indices = @transform_1, window_bounds = array<i64: 1, 19, 256>}, {transform_indices = @transform_2, window_bounds = array<i64: 1, 19, 256>}, {transform_indices = @transform_3, window_bounds = array<i64: 1, 1, 128>}]} {
    %c0_i32 = arith.constant 0 : i32
    %0 = arith.cmpi eq, %arg1, %c0_i32 : i32
    %1 = arith.extui %0 : i1 to i32
    %c0_i32_0 = arith.constant 0 : i32
    %2 = arith.cmpi ne, %1, %c0_i32_0 : i32
    scf.if %2 {
      %cst_25 = arith.constant 0.000000e+00 : f32
      %32 = vector.broadcast %cst_25 : f32 to vector<19x19xf32>
      %c0_26 = arith.constant 0 : index
      %c0_27 = arith.constant 0 : index
      %33 = vector.load %arg6[%c0_26, %c0_27] : memref<19x19xf32, #tpu.memory_space<vmem>>, vector<19x19xf32>
      tpu.vector_store %arg6[%c0_26, %c0_27], %32 {strides = array<i32>} : memref<19x19xf32, #tpu.memory_space<vmem>>, vector<19x19xf32>,
      %cst_28 = arith.constant 0.000000e+00 : f32
      %34 = vector.broadcast %cst_28 : f32 to vector<19x19xf32>
      %c0_29 = arith.constant 0 : index
      %c0_30 = arith.constant 0 : index
      %35 = vector.load %arg7[%c0_29, %c0_30] : memref<19x19xf32, #tpu.memory_space<vmem>>, vector<19x19xf32>
      tpu.vector_store %arg7[%c0_29, %c0_30], %34 {strides = array<i32>} : memref<19x19xf32, #tpu.memory_space<vmem>>, vector<19x19xf32>,
      %cst_31 = arith.constant 0.000000e+00 : f32
      %36 = vector.broadcast %cst_31 : f32 to vector<19x1xf32>
      %c0_32 = arith.constant 0 : index
      %c0_33 = arith.constant 0 : index
      %37 = vector.load %arg8[%c0_32, %c0_33] : memref<19x1xf32, #tpu.memory_space<vmem>>, vector<19x1xf32>
      tpu.vector_store %arg8[%c0_32, %c0_33], %36 {strides = array<i32>} : memref<19x1xf32, #tpu.memory_space<vmem>>, vector<19x1xf32>,
    } else {
    }
    %c0 = arith.constant 0 : index
    %c0_1 = arith.constant 0 : index
    %c0_2 = arith.constant 0 : index
    %3 = vector.load %arg3[%c0, %c0_1, %c0_2] : memref<1x19x256xf32, #tpu.memory_space<vmem>>, vector<1x19x256xf32>
    %4 = vector.shape_cast %3 : vector<1x19x256xf32> to vector<19x256xf32>
    %c0_3 = arith.constant 0 : index
    %c0_4 = arith.constant 0 : index
    %c0_5 = arith.constant 0 : index
    %5 = vector.load %arg4[%c0_3, %c0_4, %c0_5] : memref<1x19x256xf32, #tpu.memory_space<vmem>>, vector<1x19x256xf32>
    %6 = vector.shape_cast %5 : vector<1x19x256xf32> to vector<19x256xf32>
    %c0_6 = arith.constant 0 : index
    %c0_7 = arith.constant 0 : index
    %c0_8 = arith.constant 0 : index
    %7 = vector.load %arg2[%c0_6, %c0_7, %c0_8] : memref<1x1x256xi32, #tpu.memory_space<vmem>>, vector<1x1x256xi32>
    %8 = vector.shape_cast %7 : vector<1x1x256xi32> to vector<1x256xi32>
    %9 = tpu.iota {dimensions = array<i32: 0>} : vector<19x256xi32>
    %10 = vector.broadcast %8 : vector<1x256xi32> to vector<19x256xi32>
    %11 = arith.cmpi eq, %9, %10 : vector<19x256xi32>
    %12 = arith.extui %11 : vector<19x256xi1> to vector<19x256xi32>
    %13 = arith.sitofp %12 : vector<19x256xi32> to vector<19x256xf32>
    %14 = arith.extui %11 : vector<19x256xi1> to vector<19x256xi32>
    %15 = arith.sitofp %14 : vector<19x256xi32> to vector<19x256xf32>
    %c0_9 = arith.constant 0 : index
    %c0_10 = arith.constant 0 : index
    %16 = vector.load %arg8[%c0_9, %c0_10] : memref<19x1xf32, #tpu.memory_space<vmem>>, vector<19x1xf32>
    %cst = arith.constant dense<0.000000e+00> : vector<19xf32>
    %17 = vector.multi_reduction <add>, %13, %cst [1] : vector<19x256xf32> to vector<19xf32>
    %18 = vector.shape_cast %17 : vector<19xf32> to vector<19x1xf32>
    %19 = arith.addf %16, %18 : vector<19x1xf32>
    %c0_11 = arith.constant 0 : index
    %c0_12 = arith.constant 0 : index
    %20 = vector.load %arg8[%c0_11, %c0_12] : memref<19x1xf32, #tpu.memory_space<vmem>>, vector<19x1xf32>
    tpu.vector_store %arg8[%c0_11, %c0_12], %19 {strides = array<i32>} : memref<19x1xf32, #tpu.memory_space<vmem>>, vector<19x1xf32>,
    %c0_13 = arith.constant 0 : index
    %c0_14 = arith.constant 0 : index
    %21 = vector.load %arg6[%c0_13, %c0_14] : memref<19x19xf32, #tpu.memory_space<vmem>>, vector<19x19xf32>
    %cst_15 = arith.constant dense<0.000000e+00> : vector<19x19xf32>
    %22 = tpu.matmul %15, %4, %cst_15 {dimension_numbers = #tpu.dot_dimension_numbers<[1], [1], [0], [0], [0, 0, 1, 0], [], []>} : vector<19x256xf32>, vector<19x256xf32>, vector<19x19xf32> -> vector<19x19xf32>
    %23 = arith.addf %21, %22 : vector<19x19xf32>
    %c0_16 = arith.constant 0 : index
    %c0_17 = arith.constant 0 : index
    %24 = vector.load %arg6[%c0_16, %c0_17] : memref<19x19xf32, #tpu.memory_space<vmem>>, vector<19x19xf32>
    tpu.vector_store %arg6[%c0_16, %c0_17], %23 {strides = array<i32>} : memref<19x19xf32, #tpu.memory_space<vmem>>, vector<19x19xf32>,
    %c0_18 = arith.constant 0 : index
    %c0_19 = arith.constant 0 : index
    %25 = vector.load %arg7[%c0_18, %c0_19] : memref<19x19xf32, #tpu.memory_space<vmem>>, vector<19x19xf32>
    %cst_20 = arith.constant dense<0.000000e+00> : vector<19x19xf32>
    %26 = tpu.matmul %15, %6, %cst_20 {dimension_numbers = #tpu.dot_dimension_numbers<[1], [1], [0], [0], [0, 0, 1, 0], [], []>} : vector<19x256xf32>, vector<19x256xf32>, vector<19x19xf32> -> vector<19x19xf32>
    %27 = arith.addf %25, %26 : vector<19x19xf32>
    %c0_21 = arith.constant 0 : index
    %c0_22 = arith.constant 0 : index
    %28 = vector.load %arg7[%c0_21, %c0_22] : memref<19x19xf32, #tpu.memory_space<vmem>>, vector<19x19xf32>
    tpu.vector_store %arg7[%c0_21, %c0_22], %27 {strides = array<i32>} : memref<19x19xf32, #tpu.memory_space<vmem>>, vector<19x19xf32>,
    %c0_i32_23 = arith.constant 0 : i32
    %29 = arith.cmpi eq, %arg1, %c0_i32_23 : i32
    %30 = arith.extui %29 : i1 to i32
    %c0_i32_24 = arith.constant 0 : i32
    %31 = arith.cmpi ne, %30, %c0_i32_24 : i32
    scf.if %31 {
      %c0_25 = arith.constant 0 : index
      %c0_26 = arith.constant 0 : index
      %32 = vector.load %arg8[%c0_25, %c0_26] : memref<19x1xf32, #tpu.memory_space<vmem>>, vector<19x1xf32>
      %cst_27 = arith.constant 9.99999997E-7 : f32
      %33 = vector.broadcast %cst_27 : f32 to vector<19x1xf32>
      %34 = arith.addf %32, %33 : vector<19x1xf32>
      %cst_28 = arith.constant 1.000000e+00 : f32
      %35 = vector.broadcast %cst_28 : f32 to vector<19x1xf32>
      %36 = arith.divf %35, %34 : vector<19x1xf32>
      %c0_29 = arith.constant 0 : index
      %c0_30 = arith.constant 0 : index
      %37 = vector.load %arg6[%c0_29, %c0_30] : memref<19x19xf32, #tpu.memory_space<vmem>>, vector<19x19xf32>
      %38 = vector.broadcast %36 : vector<19x1xf32> to vector<19x19xf32>
      %39 = arith.mulf %37, %38 : vector<19x19xf32>
      %c0_31 = arith.constant 0 : index
      %c0_32 = arith.constant 0 : index
      %40 = vector.load %arg7[%c0_31, %c0_32] : memref<19x19xf32, #tpu.memory_space<vmem>>, vector<19x19xf32>
      %41 = vector.broadcast %36 : vector<19x1xf32> to vector<19x19xf32>
      %42 = arith.mulf %40, %41 : vector<19x19xf32>
      %43 = arith.mulf %39, %39 : vector<19x19xf32>
      %cst_33 = arith.constant dense<0.000000e+00> : vector<19xf32>
      %44 = vector.multi_reduction <add>, %43, %cst_33 [1] : vector<19x19xf32> to vector<19xf32>
      %45 = vector.shape_cast %44 : vector<19xf32> to vector<19x1xf32>
      %cst_34 = arith.constant dense<0.000000e+00> : vector<19xf32>
      %46 = vector.multi_reduction <add>, %39, %cst_34 [1] : vector<19x19xf32> to vector<19xf32>
      %47 = vector.shape_cast %46 : vector<19xf32> to vector<19x1xf32>
      %cst_35 = arith.constant dense<0.000000e+00> : vector<19x19xf32>
      %48 = tpu.matmul %39, %39, %cst_35 {dimension_numbers = #tpu.dot_dimension_numbers<[1], [1], [0], [0], [0, 0, 1, 0], [], []>} : vector<19x19xf32>, vector<19x19xf32>, vector<19x19xf32> -> vector<19x19xf32>
      %49 = tpu.transpose %45, [1, 0] : vector<19x1xf32> -> vector<1x19xf32>
      %50 = vector.broadcast %45 : vector<19x1xf32> to vector<19x19xf32>
      %51 = vector.broadcast %49 : vector<1x19xf32> to vector<19x19xf32>
      %52 = arith.addf %50, %51 : vector<19x19xf32>
      %cst_36 = arith.constant 2.000000e+00 : f32
      %53 = vector.broadcast %cst_36 : f32 to vector<19x19xf32>
      %54 = arith.mulf %53, %48 : vector<19x19xf32>
      %55 = arith.subf %52, %54 : vector<19x19xf32>
      %56 = tpu.transpose %47, [1, 0] : vector<19x1xf32> -> vector<1x19xf32>
      %57 = vector.broadcast %47 : vector<19x1xf32> to vector<19x19xf32>
      %58 = vector.broadcast %56 : vector<1x19xf32> to vector<19x19xf32>
      %59 = arith.subf %57, %58 : vector<19x19xf32>
      %cst_37 = arith.constant 2.000000e-06 : f32
      %60 = vector.broadcast %cst_37 : f32 to vector<19x19xf32>
      %61 = arith.mulf %60, %59 : vector<19x19xf32>
      %62 = arith.addf %55, %61 : vector<19x19xf32>
      %cst_38 = arith.constant 1.900000e-11 : f32
      %63 = vector.broadcast %cst_38 : f32 to vector<19x19xf32>
      %64 = arith.addf %62, %63 : vector<19x19xf32>
      %cst_39 = arith.constant 0.000000e+00 : f32
      %65 = vector.broadcast %cst_39 : f32 to vector<19x19xf32>
      %66 = arith.maximumf %64, %65 : vector<19x19xf32>
      %67 = math.sqrt %66 : vector<19x19xf32>
      %68 = arith.mulf %42, %42 : vector<19x19xf32>
      %cst_40 = arith.constant dense<0.000000e+00> : vector<19xf32>
      %69 = vector.multi_reduction <add>, %68, %cst_40 [1] : vector<19x19xf32> to vector<19xf32>
      %70 = vector.shape_cast %69 : vector<19xf32> to vector<19x1xf32>
      %cst_41 = arith.constant dense<0.000000e+00> : vector<19xf32>
      %71 = vector.multi_reduction <add>, %42, %cst_41 [1] : vector<19x19xf32> to vector<19xf32>
      %72 = vector.shape_cast %71 : vector<19xf32> to vector<19x1xf32>
      %cst_42 = arith.constant dense<0.000000e+00> : vector<19x19xf32>
      %73 = tpu.matmul %42, %42, %cst_42 {dimension_numbers = #tpu.dot_dimension_numbers<[1], [1], [0], [0], [0, 0, 1, 0], [], []>} : vector<19x19xf32>, vector<19x19xf32>, vector<19x19xf32> -> vector<19x19xf32>
      %74 = tpu.transpose %70, [1, 0] : vector<19x1xf32> -> vector<1x19xf32>
      %75 = vector.broadcast %70 : vector<19x1xf32> to vector<19x19xf32>
      %76 = vector.broadcast %74 : vector<1x19xf32> to vector<19x19xf32>
      %77 = arith.addf %75, %76 : vector<19x19xf32>
      %cst_43 = arith.constant 2.000000e+00 : f32
      %78 = vector.broadcast %cst_43 : f32 to vector<19x19xf32>
      %79 = arith.mulf %78, %73 : vector<19x19xf32>
      %80 = arith.subf %77, %79 : vector<19x19xf32>
      %81 = tpu.transpose %72, [1, 0] : vector<19x1xf32> -> vector<1x19xf32>
      %82 = vector.broadcast %72 : vector<19x1xf32> to vector<19x19xf32>
      %83 = vector.broadcast %81 : vector<1x19xf32> to vector<19x19xf32>
      %84 = arith.subf %82, %83 : vector<19x19xf32>
      %cst_44 = arith.constant 2.000000e-06 : f32
      %85 = vector.broadcast %cst_44 : f32 to vector<19x19xf32>
      %86 = arith.mulf %85, %84 : vector<19x19xf32>
      %87 = arith.addf %80, %86 : vector<19x19xf32>
      %cst_45 = arith.constant 1.900000e-11 : f32
      %88 = vector.broadcast %cst_45 : f32 to vector<19x19xf32>
      %89 = arith.addf %87, %88 : vector<19x19xf32>
      %cst_46 = arith.constant 0.000000e+00 : f32
      %90 = vector.broadcast %cst_46 : f32 to vector<19x19xf32>
      %91 = arith.maximumf %89, %90 : vector<19x19xf32>
      %92 = math.sqrt %91 : vector<19x19xf32>
      %93 = arith.subf %92, %67 : vector<19x19xf32>
      %94 = tpu.iota {dimensions = array<i32: 0>} : vector<19x19xi32>
      %95 = tpu.iota {dimensions = array<i32: 1>} : vector<19x19xi32>
      %96 = arith.cmpi slt, %94, %95 : vector<19x19xi32>
      %97 = arith.extui %96 : vector<19x19xi1> to vector<19x19xi32>
      %98 = arith.sitofp %97 : vector<19x19xi32> to vector<19x19xf32>
      %99 = arith.mulf %98, %93 : vector<19x19xf32>
      %100 = arith.mulf %99, %93 : vector<19x19xf32>
      %101 = vector.shape_cast %100 : vector<19x19xf32> to vector<1x19x19xf32>
      %cst_47 = arith.constant dense<0.000000e+00> : vector<1xf32>
      %102 = vector.multi_reduction <add>, %101, %cst_47 [1, 2] : vector<1x19x19xf32> to vector<1xf32>
      %103 = vector.shape_cast %102 : vector<1xf32> to vector<1x1x1xf32>
      %104 = vector.extract %103[0, 0, 0] : f32 from vector<1x1x1xf32>
      %cst_48 = arith.constant 5.000000e-01 : f32
      %105 = arith.mulf %cst_48, %104 : f32
      %106 = vector.broadcast %105 : f32 to vector<1x1x128xf32>
      %c0_49 = arith.constant 0 : index
      %c0_50 = arith.constant 0 : index
      %c0_51 = arith.constant 0 : index
      %107 = vector.load %arg5[%c0_49, %c0_50, %c0_51] : memref<1x1x128xf32, #tpu.memory_space<vmem>>, vector<1x1x128xf32>
      tpu.vector_store %arg5[%c0_49, %c0_50, %c0_51], %106 {strides = array<i32>} : memref<1x1x128xf32, #tpu.memory_space<vmem>>, vector<1x1x128xf32>,
    } else {
    }
    return
  }
  func.func @transform_0(%arg0: i32, %arg1: i32) -> (i32, i32, i32) {
    %c0_i32 = arith.constant 0 : i32
    %c0_i32_0 = arith.constant 0 : i32
    return %arg0, %c0_i32, %arg1 : i32, i32, i32
  }
  func.func @transform_1(%arg0: i32, %arg1: i32) -> (i32, i32, i32) {
    %c0_i32 = arith.constant 0 : i32
    %c0_i32_0 = arith.constant 0 : i32
    return %arg0, %c0_i32, %arg1 : i32, i32, i32
  }
  func.func @transform_2(%arg0: i32, %arg1: i32) -> (i32, i32, i32) {
    %c0_i32 = arith.constant 0 : i32
    %c0_i32_0 = arith.constant 0 : i32
    return %arg0, %c0_i32, %arg1 : i32, i32, i32
  }
  func.func @transform_3(%arg0: i32, %arg1: i32) -> (i32, i32, i32) {
    %c0_i32 = arith.constant 0 : i32
    %c0_i32_0 = arith.constant 0 : i32
    %c0_i32_1 = arith.constant 0 : i32
    return %arg0, %c0_i32, %c0_i32_0 : i32, i32, i32
  }
}

</mosaic_0001>

<llo_original>
// kernel: tpu_custom_call.1
$region0: #{tpu_custom_call.1}
  #allocation0 [shape = 'u32[]', space=smem, size = 0x4, offset = 0x4, fixed_abs, tag = 'smem constant byte address 0x4 - core index']
  #allocation1 [shape = 'u32[144,128]{1,0:T(1,128)}', space=vmem, size = 0x12000, scoped, tag = 'internal scratch']
  #allocation2 [shape = 'f32[19,19]{1,0:T(8,128)}', space=vmem, size = 0x3000, scoped, tag = 'scratch operand']
  #allocation3 [shape = 'f32[19,19]{1,0:T(8,128)}', space=vmem, size = 0x3000, scoped, tag = 'scratch operand']
  #allocation4 [shape = 'f32[19,1]{1,0:T(8,128)}', space=vmem, size = 0x3000, scoped, tag = 'scratch operand']
  %s0 = inlined_call_operand.vmem [shape: s32[2,1,256], index: 0, kind: input, shape index: {}]
  %s1 = inlined_call_operand.vmem [shape: f32[2,19,256], index: 1, kind: input, shape index: {}]
  %s2 = inlined_call_operand.vmem [shape: f32[2,19,256], index: 2, kind: input, shape index: {}]
  %s3 = inlined_call_operand.hbm [shape: f32[2,1,128], index: 3, kind: output, shape index: {}]
  %s4 = sld [smem:[#allocation0]]
  $region53: #{tpu_custom_call.1} parent=0
    _
  %s6 = ssub.s32 1, %s4
  %s7 = scalar_select 0, %s6, %s4
  $region1: #{tpu_custom_call.1} parent=0
    #allocation5 [shape = 'u8[1024]{0}', space=vmem, size = 0x400, scoped, tag = 'output window, operand 0']
    #allocation6 [shape = 's32[2]{0}', space=sflag, size = 0x8, scoped, tag = 'scoped memory for tpu_custom_call.1']
    %8 = vsyncpa [#allocation6], 0
    %s9 = scalar_lea.sflag [#allocation6], 1
    %10 = vsyncpa %s9, 0
    loop: start=0, step=1, limit=4
    $region2: #{tpu_custom_call.1} parent=1 // loop_pre_header
      _
    $region3: #{tpu_custom_call.1} parent=1 // loop_header
      %s12 = sphi 0, %s16
      %p13 = scmp.ge.s32.totalorder %s12, 4
      %s19 = sphi 0, %s31
      %s20 = sphi 0, %s27
      %s21 = sphi 0, %s19
      %s22 = sphi 0, %s20
      %s23 = sphi 0, %s21
      %s24 = sphi 0, %s22
      %s36 = sphi 0, %s38
      %s39 = sphi 0, %s36
      %s40 = sphi 0, %s39
      %s56 = sphi 0, %s40
      %s64 = sphi 0, %s66
      %s67 = sphi 0, %s64
      %s68 = sphi 0, %s67
      %s84 = sphi 0, %s68
      %s92 = sphi 0, %s94
      %s95 = sphi 0, %s92
      %s96 = sphi 0, %s95
      %s112 = sphi 0, %s96
      %s118 = sphi 0, %s120
      %s121 = sphi 0, %s118
      %s122 = sphi 0, %s121
      %s138 = sphi 0, %s122
    $region4: #{tpu_custom_call.1} parent=1 // loop_header_branch
      %15 = sbr.rel (%p13) target = $region8
    $region5: #{tpu_custom_call.1} parent=1 // loop_body
      %s17 = ssub.s32 %s12, 1
      %s18 = ssub.s32 %s12, 2
      %s25 = sadd.s32 1, %s20
      %p26 = scmp.ge.s32.totalorder %s25, 1
      %s27 = scalar_select %p26, 0, %s25
      %s28 = sadd.s32 1, %s19
      %s29 = scalar_select %p26, %s28, %s19
      %p30 = scmp.ge.s32.totalorder %s29, 2
      %s31 = scalar_select %p30, 0, %s29
      %s32 = ssub.s32 %s19, %s31
      %s33 = ssub.s32 %s20, %s27
      %s34 = sor.u32 %s32, %s33
      %p35 = scmp.eq.s32.totalorder %s34, 0
      %s37 = sadd.s32 %s36, 1
      %s38 = scalar_select %p35, %s36, %s37
      %p41 = pneg %p35
      %p42 = scmp.eq.s32.totalorder %s12, 1
      %p43 = por %p41, %p42
      %p44 = scmp.ne.s32.totalorder %s36, %s39
      %p45 = scmp.eq.s32.totalorder %s12, 0
      %p46 = por %p44, %p45
      %p47 = scmp.ne.s32.totalorder %s36, %s39
      %p48 = scmp.eq.s32.totalorder %s17, 1
      %p49 = por %p47, %p48
      %p50 = scmp.ne.s32.totalorder %s39, %s40
      %p51 = scmp.eq.s32.totalorder %s17, 0
      %p52 = por %p50, %p51
      %p53 = scmp.ne.s32.totalorder %s39, %s40
      %p54 = scmp.eq.s32.totalorder %s18, 1
      %p55 = por %p53, %p54
      %p57 = scmp.ne.s32.totalorder %s40, %s56
      %p58 = scmp.eq.s32.totalorder %s18, 0
      %p59 = por %p57, %p58
      %s60 = ssub.s32 %s19, %s31
      %s61 = ssub.s32 %s20, %s27
      %s62 = sor.u32 %s60, %s61
      %p63 = scmp.eq.s32.totalorder %s62, 0
      %s65 = sadd.s32 %s64, 1
      %s66 = scalar_select %p63, %s64, %s65
      %p69 = pneg %p63
      %p70 = scmp.eq.s32.totalorder %s12, 1
      %p71 = por %p69, %p70
      %p72 = scmp.ne.s32.totalorder %s64, %s67
      %p73 = scmp.eq.s32.totalorder %s12, 0
      %p74 = por %p72, %p73
      %p75 = scmp.ne.s32.totalorder %s64, %s67
      %p76 = scmp.eq.s32.totalorder %s17, 1
      %p77 = por %p75, %p76
      %p78 = scmp.ne.s32.totalorder %s67, %s68
      %p79 = scmp.eq.s32.totalorder %s17, 0
      %p80 = por %p78, %p79
      %p81 = scmp.ne.s32.totalorder %s67, %s68
      %p82 = scmp.eq.s32.totalorder %s18, 1
      %p83 = por %p81, %p82
      %p85 = scmp.ne.s32.totalorder %s68, %s84
      %p86 = scmp.eq.s32.totalorder %s18, 0
      %p87 = por %p85, %p86
      %s88 = ssub.s32 %s19, %s31
      %s89 = ssub.s32 %s20, %s27
      %s90 = sor.u32 %s88, %s89
      %p91 = scmp.eq.s32.totalorder %s90, 0
      %s93 = sadd.s32 %s92, 1
      %s94 = scalar_select %p91, %s92, %s93
      %p97 = pneg %p91
      %p98 = scmp.eq.s32.totalorder %s12, 1
      %p99 = por %p97, %p98
      %p100 = scmp.ne.s32.totalorder %s92, %s95
      %p101 = scmp.eq.s32.totalorder %s12, 0
      %p102 = por %p100, %p101
      %p103 = scmp.ne.s32.totalorder %s92, %s95
      %p104 = scmp.eq.s32.totalorder %s17, 1
      %p105 = por %p103, %p104
      %p106 = scmp.ne.s32.totalorder %s95, %s96
      %p107 = scmp.eq.s32.totalorder %s17, 0
      %p108 = por %p106, %p107
      %p109 = scmp.ne.s32.totalorder %s95, %s96
      %p110 = scmp.eq.s32.totalorder %s18, 1
      %p111 = por %p109, %p110
      %p113 = scmp.ne.s32.totalorder %s96, %s112
      %p114 = scmp.eq.s32.totalorder %s18, 0
      %p115 = por %p113, %p114
      %s116 = ssub.s32 %s19, %s31
      %p117 = scmp.eq.s32.totalorder %s116, 0
      %s119 = sadd.s32 %s118, 1
      %s120 = scalar_select %p117, %s118, %s119
      %p123 = pneg %p117
      %p124 = scmp.eq.s32.totalorder %s12, 1
      %p125 = por %p123, %p124
      %p126 = scmp.ne.s32.totalorder %s118, %s121
      %p127 = scmp.eq.s32.totalorder %s12, 0
      %p128 = por %p126, %p127
      %p129 = scmp.ne.s32.totalorder %s118, %s121
      %p130 = scmp.eq.s32.totalorder %s17, 1
      %p131 = por %p129, %p130
      %p132 = scmp.ne.s32.totalorder %s121, %s122
      %p133 = scmp.eq.s32.totalorder %s17, 0
      %p134 = por %p132, %p133
      %p135 = scmp.ne.s32.totalorder %s121, %s122
      %p136 = scmp.eq.s32.totalorder %s18, 1
      %p137 = por %p135, %p136
      %p139 = scmp.ne.s32.totalorder %s122, %s138
      %p140 = scmp.eq.s32.totalorder %s18, 0
      %p141 = por %p139, %p140
      %p142 = scmp.le.s32.totalorder 1, %s12
      %p143 = scmp.lt.s32.totalorder %s12, 3
      %p144 = pnand %p142, %p143
      %p145 = pneg %p144
      // Predicated region
      $region9: #{tpu_custom_call.1} parent=5 // pred_check
        _
      $region10: #{tpu_custom_call.1} parent=5 // pred_check_branch
        %147 = sbr.rel (%p144) target = $region12
      $region11: #{tpu_custom_call.1} parent=5 // pred_region
        %s148 = ssub.s32 %s12, 1
      $region12: #{tpu_custom_call.1} parent=5 // pred_fallthru
        _
      %p149 = scmp.lt.s32.totalorder %s12, 2
      // Predicated region
      $region13: #{tpu_custom_call.1} parent=5 // pred_check
        %p150 = pneg %p149
      $region14: #{tpu_custom_call.1} parent=5 // pred_check_branch
        %152 = sbr.rel (%p150) target = $region16
      $region15: #{tpu_custom_call.1} parent=5 // pred_region
        // Predicated region
        $region17: #{tpu_custom_call.1} parent=15 // pred_check
          %p153 = pneg %p46
        $region18: #{tpu_custom_call.1} parent=15 // pred_check_branch
          %155 = sbr.rel (%p153) target = $region20
        $region19: #{tpu_custom_call.1} parent=15 // pred_region
          %s156 = smul.u32 2, %s20
          %p157 = scmp.lt.s32.totalorder %s19, 1
          %s158 = scalar_select %p157, %s19, 1
          %p159 = scmp.lt.s32.totalorder %s156, 1
          %s160 = scalar_select %p159, %s156, 1
          %s161 = smul.addr %s158, 2
          %s162 = sadd.s32 %s160, %s161
          %s163 = scalar_lea.vmem %s0, %s162
          %s164 = smul.u32 2, %s20
        $region20: #{tpu_custom_call.1} parent=15 // pred_fallthru
          _
        // Predicated region
        $region21: #{tpu_custom_call.1} parent=15 // pred_check
          %p165 = pneg %p74
        $region22: #{tpu_custom_call.1} parent=15 // pred_check_branch
          %167 = sbr.rel (%p165) target = $region24
        $region23: #{tpu_custom_call.1} parent=15 // pred_region
          %s168 = smul.u32 2, %s20
          %p169 = scmp.lt.s32.totalorder %s19, 1
          %s170 = scalar_select %p169, %s19, 1
          %p171 = scmp.lt.s32.totalorder %s168, 1
          %s172 = scalar_select %p171, %s168, 1
          %s173 = smul.addr %s170, 6
          %s174 = sadd.s32 %s172, %s173
          %s175 = smul.addr %s174, 8
          %s176 = scalar_lea.vmem %s1, %s175
          %s177 = smul.u32 2, %s20
        $region24: #{tpu_custom_call.1} parent=15 // pred_fallthru
          _
        // Predicated region
        $region25: #{tpu_custom_call.1} parent=15 // pred_check
          %p178 = pneg %p102
        $region26: #{tpu_custom_call.1} parent=15 // pred_check_branch
          %180 = sbr.rel (%p178) target = $region28
        $region27: #{tpu_custom_call.1} parent=15 // pred_region
          %s181 = smul.u32 2, %s20
          %p182 = scmp.lt.s32.totalorder %s19, 1
          %s183 = scalar_select %p182, %s19, 1
          %p184 = scmp.lt.s32.totalorder %s181, 1
          %s185 = scalar_select %p184, %s181, 1
          %s186 = smul.addr %s183, 6
          %s187 = sadd.s32 %s185, %s186
          %s188 = smul.addr %s187, 8
          %s189 = scalar_lea.vmem %s2, %s188
          %s190 = smul.u32 2, %s20
        $region28: #{tpu_custom_call.1} parent=15 // pred_fallthru
          _
      $region16: #{tpu_custom_call.1} parent=5 // pred_fallthru
        _
      %p191 = scmp.le.s32.totalorder 1, %s12
      %p192 = scmp.lt.s32.totalorder %s12, 3
      %p193 = pnand %p191, %p192
      %p194 = pneg %p193
      // Predicated region
      $region29: #{tpu_custom_call.1} parent=5 // pred_check
        _
      $region30: #{tpu_custom_call.1} parent=5 // pred_check_branch
        %196 = sbr.rel (%p193) target = $region32
      $region31: #{tpu_custom_call.1} parent=5 // pred_region
        %s197 = ssub.s32 %s12, 1
        %s198 = smul.u32 2, %s22
        %p199 = scmp.lt.s32.totalorder %s21, 1
        %s200 = scalar_select %p199, %s21, 1
        %p201 = scmp.lt.s32.totalorder %s198, 1
        %s202 = scalar_select %p201, %s198, 1
        %s203 = smul.addr %s200, 2
        %s204 = sadd.s32 %s202, %s203
        %s205 = scalar_lea.vmem %s0, %s204
        %p206 = pneg %p52
        %p207 = pneg %p49
        %s208 = smul.u32 2, %s22
        %p209 = scmp.lt.s32.totalorder %s21, 1
        %s210 = scalar_select %p209, %s21, 1
        %p211 = scmp.lt.s32.totalorder %s208, 1
        %s212 = scalar_select %p211, %s208, 1
        %s213 = smul.addr %s210, 6
        %s214 = sadd.s32 %s212, %s213
        %s215 = smul.addr %s214, 8
        %s216 = scalar_lea.vmem %s1, %s215
        %p217 = pneg %p80
        %p218 = pneg %p77
        %s219 = smul.u32 2, %s22
        %p220 = scmp.lt.s32.totalorder %s21, 1
        %s221 = scalar_select %p220, %s21, 1
        %p222 = scmp.lt.s32.totalorder %s219, 1
        %s223 = scalar_select %p222, %s219, 1
        %s224 = smul.addr %s221, 6
        %s225 = sadd.s32 %s223, %s224
        %s226 = smul.addr %s225, 8
        %s227 = scalar_lea.vmem %s2, %s226
        %p228 = pneg %p108
        %p229 = pneg %p105
        %p230 = pneg %p134
        %p231 = pneg %p131
        %s232 = sand.u32 %s121, 1
        %s233 = scalar_lea.sflag [#allocation6], %s232
        %s234 = sand.u32 %s121, 1
        %s235 = scalar_lea.vmem [#allocation5], %s234
        %s236 = smul.u32 2, %s22
        %p237 = scmp.lt.s32.totalorder %s21, 1
        %s238 = scalar_select %p237, %s21, 1
        %p239 = scmp.lt.s32.totalorder %s236, 1
        %s240 = scalar_select %p239, %s236, 1
        %s241 = smul.addr %s238, 2
        %s242 = sadd.s32 %s240, %s241
        %s243 = scalar_lea.vmem %s0, %s242
        %s244 = smul.u32 2, %s22
        %s245 = smul.u32 2, %s22
        %p246 = scmp.lt.s32.totalorder %s21, 1
        %s247 = scalar_select %p246, %s21, 1
        %p248 = scmp.lt.s32.totalorder %s245, 1
        %s249 = scalar_select %p248, %s245, 1
        %s250 = smul.addr %s247, 6
        %s251 = sadd.s32 %s249, %s250
        %s252 = smul.addr %s251, 8
        %s253 = scalar_lea.vmem %s1, %s252
        %s254 = smul.u32 2, %s22
        %s255 = smul.u32 2, %s22
        %p256 = scmp.lt.s32.totalorder %s21, 1
        %s257 = scalar_select %p256, %s21, 1
        %p258 = scmp.lt.s32.totalorder %s255, 1
        %s259 = scalar_select %p258, %s255, 1
        %s260 = smul.addr %s257, 6
        %s261 = sadd.s32 %s259, %s260
        %s262 = smul.addr %s261, 8
        %s263 = scalar_lea.vmem %s2, %s262
        %s264 = smul.u32 2, %s22
        %p265 = scmp.eq.s32.totalorder %s22, 0
        // Predicated region
        $region33: #{tpu_custom_call.1} parent=31 // pred_check
          %p266 = pneg %p265
        $region34: #{tpu_custom_call.1} parent=31 // pred_check_branch
          %268 = sbr.rel (%p266) target = $region36
        $region35: #{tpu_custom_call.1} parent=31 // pred_region
          %vm269 = vcmask 154624
          %270 = vst.msk [vmem:[#allocation2] sm:$0xff] %vm269, 0.0
          %271 = vst.msk [vmem:[#allocation2 + $0x8] sm:$0xff] %vm269, 0.0
          %vm272 = vcmask 149504
          %273 = vst.msk [vmem:[#allocation2 + $0x10] sm:$0x7] %vm272, 0.0
          %274 = vst.msk [vmem:[#allocation3] sm:$0xff] %vm269, 0.0
          %275 = vst.msk [vmem:[#allocation3 + $0x8] sm:$0xff] %vm269, 0.0
          %276 = vst.msk [vmem:[#allocation3 + $0x10] sm:$0x7] %vm272, 0.0
          %vm277 = vcmask 7168
          %278 = vst.msk [vmem:[#allocation4] sm:$0xff] %vm277, 0.0
          %279 = vst.msk [vmem:[#allocation4 + $0x8] sm:$0xff] %vm277, 0.0
          %vm280 = vcmask 2048
          %281 = vst.msk [vmem:[#allocation4 + $0x10] sm:$0x7] %vm280, 0.0
        $region36: #{tpu_custom_call.1} parent=31 // pred_fallthru
          _
        %v282 = vld [vmem:[%s253] sm:$0xff]
        %v283 = vld [vmem:[%s253 + $0x8] sm:$0xff]
        %v284 = vld [vmem:[%s253 + $0x10] sm:$0xff]
        %v285 = vld [vmem:[%s253 + $0x18] sm:$0xff]
        %v286 = vld [vmem:[%s253 + $0x20] sm:$0x7]
        %v287 = vld [vmem:[%s253 + $0x28] sm:$0x7]
        %v288 = vld [vmem:[%s263] sm:$0xff]
        %v289 = vld [vmem:[%s263 + $0x8] sm:$0xff]
        %v290 = vld [vmem:[%s263 + $0x10] sm:$0xff]
        %v291 = vld [vmem:[%s263 + $0x18] sm:$0xff]
        %v292 = vld [vmem:[%s263 + $0x20] sm:$0x7]
        %v293 = vld [vmem:[%s263 + $0x28] sm:$0x7]
        %v294 = vld [vmem:[%s243] sm:$0x3]
        %v295 = vlaneseq
        %v296 = vshrl.u32 %v295, 7
        %v297 = vadd.s32 %v296, 8
        %v298 = vadd.s32 %v296, 16
        %v299 = vlaneseq
        %v300 = vshrl.u32 %v299, 7
        %v301 = vsub.s32 0, %v300
        %v302 = vrot.slane %v294, %v301
        %v303 = vlaneseq
        %v304 = vshrl.u32 %v303, 7
        %v305 = vsub.s32 1, %v304
        %v306 = vrot.slane %v294, %v305
        %vm307 = vcmp.eq.s32.totalorder %v296, %v302
        %vm308 = vcmp.eq.s32.totalorder %v296, %v306
        %vm309 = vcmp.eq.s32.totalorder %v297, %v302
        %vm310 = vcmp.eq.s32.totalorder %v297, %v306
        %vm311 = vcmp.eq.s32.totalorder %v298, %v302
        %vm312 = vcmp.eq.s32.totalorder %v298, %v306
        %v313 = vsel %vm307, 1, 0
        %v314 = vsel %vm308, 1, 0
        %v315 = vsel %vm309, 1, 0
        %v316 = vsel %vm310, 1, 0
        %v317 = vsel %vm311, 1, 0
        %v318 = vsel %vm312, 1, 0
        %v319 = vcvt.s32.f32 %v313
        %v320 = vcvt.s32.f32 %v314
        %v321 = vcvt.s32.f32 %v315
        %v322 = vcvt.s32.f32 %v316
        %v323 = vcvt.s32.f32 %v317
        %v324 = vcvt.s32.f32 %v318
        %v325 = vld [vmem:[#allocation4] sm:$0xff]
        %v326 = vld [vmem:[#allocation4 + $0x8] sm:$0xff]
        %v327 = vld [vmem:[#allocation4 + $0x10] sm:$0x7]
        %v328 = vadd.f32 %v319, %v320
        %329 = vadd.xlane.f32.xlu0 %v328
        %v330 = vpop.xlane.xlu0 %329
        %v331 = vadd.f32 %v321, %v322
        %332 = vadd.xlane.f32.xlu0 %v331
        %v333 = vpop.xlane.xlu0 %332
        %vm334 = vcmask 1042432
        %v335 = vsel %vm334, %v323, 0.0
        %v336 = vsel %vm334, %v324, 0.0
        %v337 = vadd.f32 %v335, %v336
        %338 = vadd.xlane.f32.xlu0 %v337
        %v339 = vpop.xlane.xlu0 %338
        %v340 = vadd.f32 %v325, %v330
        %v341 = vadd.f32 %v326, %v333
        %v342 = vadd.f32 %v327, %v339
        %vm343 = vcmask 7168
        %344 = vst.msk [vmem:[#allocation4] sm:$0xff] %vm343, %v340
        %345 = vst.msk [vmem:[#allocation4 + $0x8] sm:$0xff] %vm343, %v341
        %vm346 = vcmask 2048
        %347 = vst.msk [vmem:[#allocation4 + $0x10] sm:$0x7] %vm346, %v342
        %v348 = vld [vmem:[#allocation2] sm:$0xff]
        %v349 = vld [vmem:[#allocation2 + $0x8] sm:$0xff]
        %v350 = vld [vmem:[#allocation2 + $0x10] sm:$0x7]
        %351 = vmatprep.subr.mxu0 %v283
        %352 = vmatpush1.xpose.msra.mxu0 %v282
        %353 = vmatprep.subr.mxu0 %v285
        %354 = vmatpush1.xpose.msra.mxu0 %v284
        %355 = vmatprep.subr.mxu0 %v287
        %356 = vmatpush1.xpose.msra.mxu0 %v286
        %357 = vmatprep.subr.mxu0 0.0
        %358 = vmatpush1.xpose.msra.mxu0 0.0
        %359 = vmatprep.subr.mxu0 0.0
        %360 = vmatpush1.xpose.msra.mxu0 0.0
        %361 = vmatprep.subr.mxu0 0.0
        %362 = vmatpush1.xpose.msra.mxu0 0.0
        %363 = vmatprep.subr.mxu0 0.0
        %364 = vmatpush1.xpose.msra.mxu0 0.0
        %365 = vmatprep.subr.mxu0 0.0
        %366 = vmatpush1.xpose.msra.mxu0 0.0
        %367 = vmatprep.subr.mxu0 0.0
        %368 = vmatpush1.xpose.msra.mxu0 0.0
        %369 = vmatprep.subr.mxu0 0.0
        %370 = vmatpush1.xpose.msra.mxu0 0.0
        %371 = vmatprep.subr.mxu0 0.0
        %372 = vmatpush1.xpose.msra.mxu0 0.0
        %373 = vmatprep.subr.mxu0 0.0
        %374 = vmatpush1.xpose.msra.mxu0 0.0
        %375 = vmatprep.subr.mxu0 0.0
        %376 = vmatpush1.xpose.msra.mxu0 0.0
        %377 = vmatprep.subr.mxu0 0.0
        %378 = vmatpush1.xpose.msra.mxu0 0.0
        %379 = vmatprep.subr.mxu0 0.0
        %380 = vmatpush1.xpose.msra.mxu0 0.0
        %381 = vmatprep.subr.mxu0 0.0
        %382 = vmatpush1.xpose.msra.mxu0 0.0
        %383 = vmatprep.subr.mxu0 0.0
        %384 = vmatpush1.xpose.msra.mxu0 0.0
        %385 = vmatprep.subr.mxu0 0.0
        %386 = vmatpush1.xpose.msra.mxu0 0.0
        %387 = vmatprep.subr.mxu0 0.0
        %388 = vmatpush1.xpose.msra.mxu0 0.0
        %389 = vmatprep.subr.mxu0 0.0
        %390 = vmatpush1.xpose.msra.mxu0 0.0
        %391 = vmatprep.subr.mxu0 0.0
        %392 = vmatpush1.xpose.msra.mxu0 0.0
        %393 = vmatprep.subr.mxu0 0.0
        %394 = vmatpush1.xpose.msra.mxu0 0.0
        %395 = vmatprep.subr.mxu0 0.0
        %396 = vmatpush1.xpose.msra.mxu0 0.0
        %397 = vmatprep.subr.mxu0 0.0
        %398 = vmatpush1.xpose.msra.mxu0 0.0
        %399 = vmatprep.subr.mxu0 0.0
        %400 = vmatpush1.xpose.msra.mxu0 0.0
        %401 = vmatprep.subr.mxu0 0.0
        %402 = vmatpush1.xpose.msra.mxu0 0.0
        %403 = vmatprep.subr.mxu0 0.0
        %404 = vmatpush1.xpose.msra.mxu0 0.0
        %405 = vmatprep.subr.mxu0 0.0
        %406 = vmatpush1.xpose.msra.mxu0 0.0
        %407 = vmatprep.subr.mxu0 0.0
        %408 = vmatpush1.xpose.msra.mxu0 0.0
        %409 = vmatprep.subr.mxu0 0.0
        %410 = vmatpush1.xpose.msra.mxu0 0.0
        %411 = vmatprep.subr.mxu0 0.0
        %412 = vmatpush1.xpose.msra.mxu0 0.0
        %413 = vmatprep.subr.mxu0 0.0
        %414 = vmatpush1.xpose.msra.mxu0 0.0
        %415 = vmatprep.mubr.f32.mxu0 %v320
        %416 = vmatmul.mubr.f32.gmra.mrb[0].mxu0 %v319
        %v417 = vpop.f32.mrb[0].mxu0
        %v418 = vadd.f32 0.0, %v417
        %v419 = vpop.f32.mrb[0].mxu0
        %420 = vmatprep.mubr.f32.mxu0 %v322
        %421 = vmatmul.mubr.f32.gmra.mrb[0].mxu0 %v321
        %v422 = vpop.f32.mrb[0].mxu0
        %v423 = vadd.f32 0.0, %v422
        %v424 = vpop.f32.mrb[0].mxu0
        %425 = vmatprep.mubr.f32.mxu0 %v324
        %426 = vmatmul.mubr.f32.gmra.mrb[0].mxu0 %v323
        %v427 = vpop.f32.mrb[0].mxu0
        %v428 = vadd.f32 0.0, %v427
        %v429 = vpop.f32.mrb[0].mxu0
        %430 = vdwg.mxu0
        %v431 = vadd.f32 %v348, %v418
        %v432 = vadd.f32 %v349, %v423
        %v433 = vadd.f32 %v350, %v428
        %vm434 = vcmask 154624
        %435 = vst.msk [vmem:[#allocation2] sm:$0xff] %vm434, %v431
        %436 = vst.msk [vmem:[#allocation2 + $0x8] sm:$0xff] %vm434, %v432
        %vm437 = vcmask 149504
        %438 = vst.msk [vmem:[#allocation2 + $0x10] sm:$0x7] %vm437, %v433
        %v439 = vld [vmem:[#allocation3] sm:$0xff]
        %v440 = vld [vmem:[#allocation3 + $0x8] sm:$0xff]
        %v441 = vld [vmem:[#allocation3 + $0x10] sm:$0x7]
        %442 = vmatprep.subr.mxu0 %v289
        %443 = vmatpush1.xpose.msra.mxu0 %v288
        %444 = vmatprep.subr.mxu0 %v291
        %445 = vmatpush1.xpose.msra.mxu0 %v290
        %446 = vmatprep.subr.mxu0 %v293
        %447 = vmatpush1.xpose.msra.mxu0 %v292
        %448 = vmatprep.subr.mxu0 0.0
        %449 = vmatpush1.xpose.msra.mxu0 0.0
        %450 = vmatprep.subr.mxu0 0.0
        %451 = vmatpush1.xpose.msra.mxu0 0.0
        %452 = vmatprep.subr.mxu0 0.0
        %453 = vmatpush1.xpose.msra.mxu0 0.0
        %454 = vmatprep.subr.mxu0 0.0
        %455 = vmatpush1.xpose.msra.mxu0 0.0
        %456 = vmatprep.subr.mxu0 0.0
        %457 = vmatpush1.xpose.msra.mxu0 0.0
        %458 = vmatprep.subr.mxu0 0.0
        %459 = vmatpush1.xpose.msra.mxu0 0.0
        %460 = vmatprep.subr.mxu0 0.0
        %461 = vmatpush1.xpose.msra.mxu0 0.0
        %462 = vmatprep.subr.mxu0 0.0
        %463 = vmatpush1.xpose.msra.mxu0 0.0
        %464 = vmatprep.subr.mxu0 0.0
        %465 = vmatpush1.xpose.msra.mxu0 0.0
        %466 = vmatprep.subr.mxu0 0.0
        %467 = vmatpush1.xpose.msra.mxu0 0.0
        %468 = vmatprep.subr.mxu0 0.0
        %469 = vmatpush1.xpose.msra.mxu0 0.0
        %470 = vmatprep.subr.mxu0 0.0
        %471 = vmatpush1.xpose.msra.mxu0 0.0
        %472 = vmatprep.subr.mxu0 0.0
        %473 = vmatpush1.xpose.msra.mxu0 0.0
        %474 = vmatprep.subr.mxu0 0.0
        %475 = vmatpush1.xpose.msra.mxu0 0.0
        %476 = vmatprep.subr.mxu0 0.0
        %477 = vmatpush1.xpose.msra.mxu0 0.0
        %478 = vmatprep.subr.mxu0 0.0
        %479 = vmatpush1.xpose.msra.mxu0 0.0
        %480 = vmatprep.subr.mxu0 0.0
        %481 = vmatpush1.xpose.msra.mxu0 0.0
        %482 = vmatprep.subr.mxu0 0.0
        %483 = vmatpush1.xpose.msra.mxu0 0.0
        %484 = vmatprep.subr.mxu0 0.0
        %485 = vmatpush1.xpose.msra.mxu0 0.0
        %486 = vmatprep.subr.mxu0 0.0
        %487 = vmatpush1.xpose.msra.mxu0 0.0
        %488 = vmatprep.subr.mxu0 0.0
        %489 = vmatpush1.xpose.msra.mxu0 0.0
        %490 = vmatprep.subr.mxu0 0.0
        %491 = vmatpush1.xpose.msra.mxu0 0.0
        %492 = vmatprep.subr.mxu0 0.0
        %493 = vmatpush1.xpose.msra.mxu0 0.0
        %494 = vmatprep.subr.mxu0 0.0
        %495 = vmatpush1.xpose.msra.mxu0 0.0
        %496 = vmatprep.subr.mxu0 0.0
        %497 = vmatpush1.xpose.msra.mxu0 0.0
        %498 = vmatprep.subr.mxu0 0.0
        %499 = vmatpush1.xpose.msra.mxu0 0.0
        %500 = vmatprep.subr.mxu0 0.0
        %501 = vmatpush1.xpose.msra.mxu0 0.0
        %502 = vmatprep.subr.mxu0 0.0
        %503 = vmatpush1.xpose.msra.mxu0 0.0
        %504 = vmatprep.subr.mxu0 0.0
        %505 = vmatpush1.xpose.msra.mxu0 0.0
        %506 = vmatprep.mubr.f32.mxu0 %v320
        %507 = vmatmul.mubr.f32.gmra.mrb[0].mxu0 %v319
        %v508 = vpop.f32.mrb[0].mxu0
        %v509 = vadd.f32 0.0, %v508
        %v510 = vpop.f32.mrb[0].mxu0
        %511 = vmatprep.mubr.f32.mxu0 %v322
        %512 = vmatmul.mubr.f32.gmra.mrb[0].mxu0 %v321
        %v513 = vpop.f32.mrb[0].mxu0
        %v514 = vadd.f32 0.0, %v513
        %v515 = vpop.f32.mrb[0].mxu0
        %516 = vmatprep.mubr.f32.mxu0 %v324
        %517 = vmatmul.mubr.f32.gmra.mrb[0].mxu0 %v323
        %v518 = vpop.f32.mrb[0].mxu0
        %v519 = vadd.f32 0.0, %v518
        %v520 = vpop.f32.mrb[0].mxu0
        %521 = vdwg.mxu0
        %v522 = vadd.f32 %v439, %v509
        %v523 = vadd.f32 %v440, %v514
        %v524 = vadd.f32 %v441, %v519
        %525 = vst.msk [vmem:[#allocation3] sm:$0xff] %vm434, %v522
        %526 = vst.msk [vmem:[#allocation3 + $0x8] sm:$0xff] %vm434, %v523
        %527 = vst.msk [vmem:[#allocation3 + $0x10] sm:$0x7] %vm437, %v524
        // Predicated region
        $region37: #{tpu_custom_call.1} parent=31 // pred_check
          %p528 = pneg %p265
        $region38: #{tpu_custom_call.1} parent=31 // pred_check_branch
          %530 = sbr.rel (%p528) target = $region40
        $region39: #{tpu_custom_call.1} parent=31 // pred_region
          %v531 = vld [vmem:[#allocation4] sm:$0xff]
          %v532 = vld [vmem:[#allocation4 + $0x8] sm:$0xff]
          %v533 = vld [vmem:[#allocation4 + $0x10] sm:$0x7]
          %v534 = vadd.f32 %v531, 1e-06
          %v535 = vadd.f32 %v532, 1e-06
          %v536 = vadd.f32 %v533, 1e-06
          %v537 = vrcp.pop %v534
          %v538 = vmul.f32 1.0, %v537
          %v539 = vrcp.pop %v535
          %v540 = vmul.f32 1.0, %v539
          %v541 = vrcp.pop %v536
          %v542 = vmul.f32 1.0, %v541
          %v543 = vld [vmem:[#allocation2] sm:$0xff]
          %v544 = vld [vmem:[#allocation2 + $0x8] sm:$0xff]
          %v545 = vld [vmem:[#allocation2 + $0x10] sm:$0x7]
          %547 = vset.pattern.permute.xlu0 0
          %548 = vperm.xlu0 %547, %v538
          %v549 = vpop.permute.xlu0 %548
          %552 = vset.pattern.permute.xlu0 0
          %553 = vperm.xlu0 %552, %v540
          %v554 = vpop.permute.xlu0 %553
          %557 = vset.pattern.permute.xlu0 0
          %558 = vperm.xlu0 %557, %v542
          %v559 = vpop.permute.xlu0 %558
          %v561 = vmul.f32 %v543, %v549
          %v562 = vmul.f32 %v544, %v554
          %v563 = vmul.f32 %v545, %v559
          %v564 = vld [vmem:[#allocation3] sm:$0xff]
          %v565 = vld [vmem:[#allocation3 + $0x8] sm:$0xff]
          %v566 = vld [vmem:[#allocation3 + $0x10] sm:$0x7]
          %v567 = vmul.f32 %v564, %v549
          %v568 = vmul.f32 %v565, %v554
          %v569 = vmul.f32 %v566, %v559
          %v570 = vmul.f32 %v561, %v561
          %v571 = vmul.f32 %v562, %v562
          %v572 = vmul.f32 %v563, %v563
          %v573 = vsel %vm434, %v570, 0.0
          %574 = vadd.xlane.f32.xlu0 %v573
          %v575 = vpop.xlane.xlu0 %574
          %v576 = vsel %vm434, %v571, 0.0
          %577 = vadd.xlane.f32.xlu0 %v576
          %v578 = vpop.xlane.xlu0 %577
          %v579 = vsel %vm437, %v572, 0.0
          %580 = vadd.xlane.f32.xlu0 %v579
          %v581 = vpop.xlane.xlu0 %580
          %v582 = vsel %vm434, %v561, 0.0
          %583 = vadd.xlane.f32.xlu0 %v582
          %v584 = vpop.xlane.xlu0 %583
          %v585 = vsel %vm434, %v562, 0.0
          %586 = vadd.xlane.f32.xlu0 %v585
          %v587 = vpop.xlane.xlu0 %586
          %v588 = vsel %vm437, %v563, 0.0
          %589 = vadd.xlane.f32.xlu0 %v588
          %v590 = vpop.xlane.xlu0 %589
          %v592 = vsel %vm434, %v561, 0
          %v595 = vsel %vm434, %v562, 0
          %v598 = vsel %vm434, %v563, 0
          %600 = vmatprep.subr.mxu0 0.0
          %601 = vmatpush1.xpose.msra.mxu0 %v592
          %602 = vmatprep.subr.mxu0 0.0
          %603 = vmatpush1.xpose.msra.mxu0 %v595
          %604 = vmatprep.subr.mxu0 0.0
          %605 = vmatpush1.xpose.msra.mxu0 %v598
          %606 = vmatprep.subr.mxu0 0.0
          %607 = vmatpush1.xpose.msra.mxu0 0.0
          %608 = vmatprep.subr.mxu0 0.0
          %609 = vmatpush1.xpose.msra.mxu0 0.0
          %610 = vmatprep.subr.mxu0 0.0
          %611 = vmatpush1.xpose.msra.mxu0 0.0
          %612 = vmatprep.subr.mxu0 0.0
          %613 = vmatpush1.xpose.msra.mxu0 0.0
          %614 = vmatprep.subr.mxu0 0.0
          %615 = vmatpush1.xpose.msra.mxu0 0.0
          %616 = vmatprep.subr.mxu0 0.0
          %617 = vmatpush1.xpose.msra.mxu0 0.0
          %618 = vmatprep.subr.mxu0 0.0
          %619 = vmatpush1.xpose.msra.mxu0 0.0
          %620 = vmatprep.subr.mxu0 0.0
          %621 = vmatpush1.xpose.msra.mxu0 0.0
          %622 = vmatprep.subr.mxu0 0.0
          %623 = vmatpush1.xpose.msra.mxu0 0.0
          %624 = vmatprep.subr.mxu0 0.0
          %625 = vmatpush1.xpose.msra.mxu0 0.0
          %626 = vmatprep.subr.mxu0 0.0
          %627 = vmatpush1.xpose.msra.mxu0 0.0
          %628 = vmatprep.subr.mxu0 0.0
          %629 = vmatpush1.xpose.msra.mxu0 0.0
          %630 = vmatprep.subr.mxu0 0.0
          %631 = vmatpush1.xpose.msra.mxu0 0.0
          %632 = vmatprep.subr.mxu0 0.0
          %633 = vmatpush1.xpose.msra.mxu0 0.0
          %634 = vmatprep.subr.mxu0 0.0
          %635 = vmatpush1.xpose.msra.mxu0 0.0
          %636 = vmatprep.subr.mxu0 0.0
          %637 = vmatpush1.xpose.msra.mxu0 0.0
          %638 = vmatprep.subr.mxu0 0.0
          %639 = vmatpush1.xpose.msra.mxu0 0.0
          %640 = vmatprep.subr.mxu0 0.0
          %641 = vmatpush1.xpose.msra.mxu0 0.0
          %642 = vmatprep.subr.mxu0 0.0
          %643 = vmatpush1.xpose.msra.mxu0 0.0
          %644 = vmatprep.subr.mxu0 0.0
          %645 = vmatpush1.xpose.msra.mxu0 0.0
          %646 = vmatprep.subr.mxu0 0.0
          %647 = vmatpush1.xpose.msra.mxu0 0.0
          %648 = vmatprep.subr.mxu0 0.0
          %649 = vmatpush1.xpose.msra.mxu0 0.0
          %650 = vmatprep.subr.mxu0 0.0
          %651 = vmatpush1.xpose.msra.mxu0 0.0
          %652 = vmatprep.subr.mxu0 0.0
          %653 = vmatpush1.xpose.msra.mxu0 0.0
          %654 = vmatprep.subr.mxu0 0.0
          %655 = vmatpush1.xpose.msra.mxu0 0.0
          %656 = vmatprep.subr.mxu0 0.0
          %657 = vmatpush1.xpose.msra.mxu0 0.0
          %658 = vmatprep.subr.mxu0 0.0
          %659 = vmatpush1.xpose.msra.mxu0 0.0
          %660 = vmatprep.subr.mxu0 0.0
          %661 = vmatpush1.xpose.msra.mxu0 0.0
          %662 = vmatprep.subr.mxu0 0.0
          %663 = vmatpush1.xpose.msra.mxu0 0.0
          %664 = vmatprep.mubr.f32.mxu0 0.0
          %665 = vmatmul.mubr.f32.gmra.mrb[0].mxu0 %v592
          %v666 = vpop.f32.mrb[0].mxu0
          %v667 = vadd.f32 0.0, %v666
          %v668 = vpop.f32.mrb[0].mxu0
          %669 = vmatprep.mubr.f32.mxu0 0.0
          %670 = vmatmul.mubr.f32.gmra.mrb[0].mxu0 %v595
          %v671 = vpop.f32.mrb[0].mxu0
          %v672 = vadd.f32 0.0, %v671
          %v673 = vpop.f32.mrb[0].mxu0
          %674 = vmatprep.mubr.f32.mxu0 0.0
          %675 = vmatmul.mubr.f32.gmra.mrb[0].mxu0 %v598
          %v676 = vpop.f32.mrb[0].mxu0
          %v677 = vadd.f32 0.0, %v676
          %v678 = vpop.f32.mrb[0].mxu0
          %679 = vdwg.mxu0
          %680 = vxpose.xlu0.b32.start [1/16] %v575, 128
          %681 = vxpose.xlu0.b32.cont [2/16] %v578, 128
          %682 = vxpose.xlu0.b32.cont [3/16] %v581, 128
          %683 = vxpose.xlu0.b32.cont [4/16] 0.0, 128
          %684 = vxpose.xlu0.b32.cont [5/16] 0.0, 128
          %685 = vxpose.xlu0.b32.cont [6/16] 0.0, 128
          %686 = vxpose.xlu0.b32.cont [7/16] 0.0, 128
          %687 = vxpose.xlu0.b32.cont [8/16] 0.0, 128
          %688 = vxpose.xlu0.b32.cont [9/16] 0.0, 128
          %689 = vxpose.xlu0.b32.cont [10/16] 0.0, 128
          %690 = vxpose.xlu0.b32.cont [11/16] 0.0, 128
          %691 = vxpose.xlu0.b32.cont [12/16] 0.0, 128
          %692 = vxpose.xlu0.b32.cont [13/16] 0.0, 128
          %693 = vxpose.xlu0.b32.cont [14/16] 0.0, 128
          %694 = vxpose.xlu0.b32.cont [15/16] 0.0, 128
          %695 = vxpose.xlu0.b32.end [16/16] 0.0, 128
          %v696 = vpop.trf.xlu0
          %v697 = vpop.trf.xlu0
          %v698 = vpop.trf.xlu0
          %v699 = vpop.trf.xlu0
          %v700 = vpop.trf.xlu0
          %v701 = vpop.trf.xlu0
          %v702 = vpop.trf.xlu0
          %v703 = vpop.trf.xlu0
          %v704 = vpop.trf.xlu0
          %v705 = vpop.trf.xlu0
          %v706 = vpop.trf.xlu0
          %v707 = vpop.trf.xlu0
          %v708 = vpop.trf.xlu0
          %v709 = vpop.trf.xlu0
          %v710 = vpop.trf.xlu0
          %v711 = vpop.trf.xlu0
          %v712 = vlaneseq
          %v713 = vshrl.u32 %v712, 7
          %v714 = vsub.s32 0, %v713
          %v715 = vrot.slane %v696, %v714
          %v716 = vadd.f32 %v575, %v715
          %v717 = vadd.f32 %v578, %v715
          %v718 = vadd.f32 %v581, %v715
          %v719 = vmul.f32 %v667, 2.0
          %v720 = vmul.f32 %v672, 2.0
          %v721 = vmul.f32 %v677, 2.0
          %v722 = vsub.f32 %v716, %v719
          %v723 = vsub.f32 %v717, %v720
          %v724 = vsub.f32 %v718, %v721
          %725 = vxpose.xlu0.b32.start [1/16] %v584, 128
          %726 = vxpose.xlu0.b32.cont [2/16] %v587, 128
          %727 = vxpose.xlu0.b32.cont [3/16] %v590, 128
          %728 = vxpose.xlu0.b32.cont [4/16] 0.0, 128
          %729 = vxpose.xlu0.b32.cont [5/16] 0.0, 128
          %730 = vxpose.xlu0.b32.cont [6/16] 0.0, 128
          %731 = vxpose.xlu0.b32.cont [7/16] 0.0, 128
          %732 = vxpose.xlu0.b32.cont [8/16] 0.0, 128
          %733 = vxpose.xlu0.b32.cont [9/16] 0.0, 128
          %734 = vxpose.xlu0.b32.cont [10/16] 0.0, 128
          %735 = vxpose.xlu0.b32.cont [11/16] 0.0, 128
          %736 = vxpose.xlu0.b32.cont [12/16] 0.0, 128
          %737 = vxpose.xlu0.b32.cont [13/16] 0.0, 128
          %738 = vxpose.xlu0.b32.cont [14/16] 0.0, 128
          %739 = vxpose.xlu0.b32.cont [15/16] 0.0, 128
          %740 = vxpose.xlu0.b32.end [16/16] 0.0, 128
          %v741 = vpop.trf.xlu0
          %v742 = vpop.trf.xlu0
          %v743 = vpop.trf.xlu0
          %v744 = vpop.trf.xlu0
          %v745 = vpop.trf.xlu0
          %v746 = vpop.trf.xlu0
          %v747 = vpop.trf.xlu0
          %v748 = vpop.trf.xlu0
          %v749 = vpop.trf.xlu0
          %v750 = vpop.trf.xlu0
          %v751 = vpop.trf.xlu0
          %v752 = vpop.trf.xlu0
          %v753 = vpop.trf.xlu0
          %v754 = vpop.trf.xlu0
          %v755 = vpop.trf.xlu0
          %v756 = vpop.trf.xlu0
          %v757 = vlaneseq
          %v758 = vshrl.u32 %v757, 7
          %v759 = vsub.s32 0, %v758
          %v760 = vrot.slane %v741, %v759
          %v761 = vsub.f32 %v584, %v760
          %v762 = vsub.f32 %v587, %v760
          %v763 = vsub.f32 %v590, %v760
          %v764 = vmul.f32 %v761, 2e-06
          %v765 = vmul.f32 %v762, 2e-06
          %v766 = vmul.f32 %v763, 2e-06
          %v767 = vadd.f32 %v722, %v764
          %v768 = vadd.f32 %v723, %v765
          %v769 = vadd.f32 %v724, %v766
          %v770 = vadd.f32 %v767, 1.9e-11
          %v771 = vadd.f32 %v768, 1.9e-11
          %v772 = vadd.f32 %v769, 1.9e-11
          %v773 = vmax.f32 %v770, 0.0
          %v774 = vmax.f32 %v771, 0.0
          %v775 = vmax.f32 %v772, 0.0
          %v776 = vrsqrt.pop %v773
          %v777 = vmul.f32 %v773, %v776
          %vm778 = vcmp.eq.f32.partialorder %v773, inf
          %v779 = vsel %vm778, %v773, %v777
          %vm780 = vcmp.eq.f32.partialorder %v773, 0.0
          %v781 = vand.u32 %v773, 2147483648
          %v782 = vsel %vm780, %v781, %v779
          %v783 = vrsqrt.pop %v774
          %v784 = vmul.f32 %v774, %v783
          %vm785 = vcmp.eq.f32.partialorder %v774, inf
          %v786 = vsel %vm785, %v774, %v784
          %vm787 = vcmp.eq.f32.partialorder %v774, 0.0
          %v788 = vand.u32 %v774, 2147483648
          %v789 = vsel %vm787, %v788, %v786
          %v790 = vrsqrt.pop %v775
          %v791 = vmul.f32 %v775, %v790
          %vm792 = vcmp.eq.f32.partialorder %v775, inf
          %v793 = vsel %vm792, %v775, %v791
          %vm794 = vcmp.eq.f32.partialorder %v775, 0.0
          %v795 = vand.u32 %v775, 2147483648
          %v796 = vsel %vm794, %v795, %v793
          %v797 = vmul.f32 %v567, %v567
          %v798 = vmul.f32 %v568, %v568
          %v799 = vmul.f32 %v569, %v569
          %v800 = vsel %vm434, %v797, 0.0
          %801 = vadd.xlane.f32.xlu0 %v800
          %v802 = vpop.xlane.xlu0 %801
          %v803 = vsel %vm434, %v798, 0.0
          %804 = vadd.xlane.f32.xlu0 %v803
          %v805 = vpop.xlane.xlu0 %804
          %v806 = vsel %vm437, %v799, 0.0
          %807 = vadd.xlane.f32.xlu0 %v806
          %v808 = vpop.xlane.xlu0 %807
          %v809 = vsel %vm434, %v567, 0.0
          %810 = vadd.xlane.f32.xlu0 %v809
          %v811 = vpop.xlane.xlu0 %810
          %v812 = vsel %vm434, %v568, 0.0
          %813 = vadd.xlane.f32.xlu0 %v812
          %v814 = vpop.xlane.xlu0 %813
          %v815 = vsel %vm437, %v569, 0.0
          %816 = vadd.xlane.f32.xlu0 %v815
          %v817 = vpop.xlane.xlu0 %816
          %v819 = vsel %vm434, %v567, 0
          %v822 = vsel %vm434, %v568, 0
          %v825 = vsel %vm434, %v569, 0
          %827 = vmatprep.subr.mxu0 0.0
          %828 = vmatpush1.xpose.msra.mxu0 %v819
          %829 = vmatprep.subr.mxu0 0.0
          %830 = vmatpush1.xpose.msra.mxu0 %v822
          %831 = vmatprep.subr.mxu0 0.0
          %832 = vmatpush1.xpose.msra.mxu0 %v825
          %833 = vmatprep.subr.mxu0 0.0
          %834 = vmatpush1.xpose.msra.mxu0 0.0
          %835 = vmatprep.subr.mxu0 0.0
          %836 = vmatpush1.xpose.msra.mxu0 0.0
          %837 = vmatprep.subr.mxu0 0.0
          %838 = vmatpush1.xpose.msra.mxu0 0.0
          %839 = vmatprep.subr.mxu0 0.0
          %840 = vmatpush1.xpose.msra.mxu0 0.0
          %841 = vmatprep.subr.mxu0 0.0
          %842 = vmatpush1.xpose.msra.mxu0 0.0
          %843 = vmatprep.subr.mxu0 0.0
          %844 = vmatpush1.xpose.msra.mxu0 0.0
          %845 = vmatprep.subr.mxu0 0.0
          %846 = vmatpush1.xpose.msra.mxu0 0.0
          %847 = vmatprep.subr.mxu0 0.0
          %848 = vmatpush1.xpose.msra.mxu0 0.0
          %849 = vmatprep.subr.mxu0 0.0
          %850 = vmatpush1.xpose.msra.mxu0 0.0
          %851 = vmatprep.subr.mxu0 0.0
          %852 = vmatpush1.xpose.msra.mxu0 0.0
          %853 = vmatprep.subr.mxu0 0.0
          %854 = vmatpush1.xpose.msra.mxu0 0.0
          %855 = vmatprep.subr.mxu0 0.0
          %856 = vmatpush1.xpose.msra.mxu0 0.0
          %857 = vmatprep.subr.mxu0 0.0
          %858 = vmatpush1.xpose.msra.mxu0 0.0
          %859 = vmatprep.subr.mxu0 0.0
          %860 = vmatpush1.xpose.msra.mxu0 0.0
          %861 = vmatprep.subr.mxu0 0.0
          %862 = vmatpush1.xpose.msra.mxu0 0.0
          %863 = vmatprep.subr.mxu0 0.0
          %864 = vmatpush1.xpose.msra.mxu0 0.0
          %865 = vmatprep.subr.mxu0 0.0
          %866 = vmatpush1.xpose.msra.mxu0 0.0
          %867 = vmatprep.subr.mxu0 0.0
          %868 = vmatpush1.xpose.msra.mxu0 0.0
          %869 = vmatprep.subr.mxu0 0.0
          %870 = vmatpush1.xpose.msra.mxu0 0.0
          %871 = vmatprep.subr.mxu0 0.0
          %872 = vmatpush1.xpose.msra.mxu0 0.0
          %873 = vmatprep.subr.mxu0 0.0
          %874 = vmatpush1.xpose.msra.mxu0 0.0
          %875 = vmatprep.subr.mxu0 0.0
          %876 = vmatpush1.xpose.msra.mxu0 0.0
          %877 = vmatprep.subr.mxu0 0.0
          %878 = vmatpush1.xpose.msra.mxu0 0.0
          %879 = vmatprep.subr.mxu0 0.0
          %880 = vmatpush1.xpose.msra.mxu0 0.0
          %881 = vmatprep.subr.mxu0 0.0
          %882 = vmatpush1.xpose.msra.mxu0 0.0
          %883 = vmatprep.subr.mxu0 0.0
          %884 = vmatpush1.xpose.msra.mxu0 0.0
          %885 = vmatprep.subr.mxu0 0.0
          %886 = vmatpush1.xpose.msra.mxu0 0.0
          %887 = vmatprep.subr.mxu0 0.0
          %888 = vmatpush1.xpose.msra.mxu0 0.0
          %889 = vmatprep.subr.mxu0 0.0
          %890 = vmatpush1.xpose.msra.mxu0 0.0
          %891 = vmatprep.mubr.f32.mxu0 0.0
          %892 = vmatmul.mubr.f32.gmra.mrb[0].mxu0 %v819
          %v893 = vpop.f32.mrb[0].mxu0
          %v894 = vadd.f32 0.0, %v893
          %v895 = vpop.f32.mrb[0].mxu0
          %896 = vmatprep.mubr.f32.mxu0 0.0
          %897 = vmatmul.mubr.f32.gmra.mrb[0].mxu0 %v822
          %v898 = vpop.f32.mrb[0].mxu0
          %v899 = vadd.f32 0.0, %v898
          %v900 = vpop.f32.mrb[0].mxu0
          %901 = vmatprep.mubr.f32.mxu0 0.0
          %902 = vmatmul.mubr.f32.gmra.mrb[0].mxu0 %v825
          %v903 = vpop.f32.mrb[0].mxu0
          %v904 = vadd.f32 0.0, %v903
          %v905 = vpop.f32.mrb[0].mxu0
          %906 = vdwg.mxu0
          %907 = vxpose.xlu0.b32.start [1/16] %v802, 128
          %908 = vxpose.xlu0.b32.cont [2/16] %v805, 128
          %909 = vxpose.xlu0.b32.cont [3/16] %v808, 128
          %910 = vxpose.xlu0.b32.cont [4/16] 0.0, 128
          %911 = vxpose.xlu0.b32.cont [5/16] 0.0, 128
          %912 = vxpose.xlu0.b32.cont [6/16] 0.0, 128
          %913 = vxpose.xlu0.b32.cont [7/16] 0.0, 128
          %914 = vxpose.xlu0.b32.cont [8/16] 0.0, 128
          %915 = vxpose.xlu0.b32.cont [9/16] 0.0, 128
          %916 = vxpose.xlu0.b32.cont [10/16] 0.0, 128
          %917 = vxpose.xlu0.b32.cont [11/16] 0.0, 128
          %918 = vxpose.xlu0.b32.cont [12/16] 0.0, 128
          %919 = vxpose.xlu0.b32.cont [13/16] 0.0, 128
          %920 = vxpose.xlu0.b32.cont [14/16] 0.0, 128
          %921 = vxpose.xlu0.b32.cont [15/16] 0.0, 128
          %922 = vxpose.xlu0.b32.end [16/16] 0.0, 128
          %v923 = vpop.trf.xlu0
          %v924 = vpop.trf.xlu0
          %v925 = vpop.trf.xlu0
          %v926 = vpop.trf.xlu0
          %v927 = vpop.trf.xlu0
          %v928 = vpop.trf.xlu0
          %v929 = vpop.trf.xlu0
          %v930 = vpop.trf.xlu0
          %v931 = vpop.trf.xlu0
          %v932 = vpop.trf.xlu0
          %v933 = vpop.trf.xlu0
          %v934 = vpop.trf.xlu0
          %v935 = vpop.trf.xlu0
          %v936 = vpop.trf.xlu0
          %v937 = vpop.trf.xlu0
          %v938 = vpop.trf.xlu0
          %v939 = vlaneseq
          %v940 = vshrl.u32 %v939, 7
          %v941 = vsub.s32 0, %v940
          %v942 = vrot.slane %v923, %v941
          %v943 = vadd.f32 %v802, %v942
          %v944 = vadd.f32 %v805, %v942
          %v945 = vadd.f32 %v808, %v942
          %v946 = vmul.f32 %v894, 2.0
          %v947 = vmul.f32 %v899, 2.0
          %v948 = vmul.f32 %v904, 2.0
          %v949 = vsub.f32 %v943, %v946
          %v950 = vsub.f32 %v944, %v947
          %v951 = vsub.f32 %v945, %v948
          %952 = vxpose.xlu0.b32.start [1/16] %v811, 128
          %953 = vxpose.xlu0.b32.cont [2/16] %v814, 128
          %954 = vxpose.xlu0.b32.cont [3/16] %v817, 128
          %955 = vxpose.xlu0.b32.cont [4/16] 0.0, 128
          %956 = vxpose.xlu0.b32.cont [5/16] 0.0, 128
          %957 = vxpose.xlu0.b32.cont [6/16] 0.0, 128
          %958 = vxpose.xlu0.b32.cont [7/16] 0.0, 128
          %959 = vxpose.xlu0.b32.cont [8/16] 0.0, 128
          %960 = vxpose.xlu0.b32.cont [9/16] 0.0, 128
          %961 = vxpose.xlu0.b32.cont [10/16] 0.0, 128
          %962 = vxpose.xlu0.b32.cont [11/16] 0.0, 128
          %963 = vxpose.xlu0.b32.cont [12/16] 0.0, 128
          %964 = vxpose.xlu0.b32.cont [13/16] 0.0, 128
          %965 = vxpose.xlu0.b32.cont [14/16] 0.0, 128
          %966 = vxpose.xlu0.b32.cont [15/16] 0.0, 128
          %967 = vxpose.xlu0.b32.end [16/16] 0.0, 128
          %v968 = vpop.trf.xlu0
          %v969 = vpop.trf.xlu0
          %v970 = vpop.trf.xlu0
          %v971 = vpop.trf.xlu0
          %v972 = vpop.trf.xlu0
          %v973 = vpop.trf.xlu0
          %v974 = vpop.trf.xlu0
          %v975 = vpop.trf.xlu0
          %v976 = vpop.trf.xlu0
          %v977 = vpop.trf.xlu0
          %v978 = vpop.trf.xlu0
          %v979 = vpop.trf.xlu0
          %v980 = vpop.trf.xlu0
          %v981 = vpop.trf.xlu0
          %v982 = vpop.trf.xlu0
          %v983 = vpop.trf.xlu0
          %v984 = vlaneseq
          %v985 = vshrl.u32 %v984, 7
          %v986 = vsub.s32 0, %v985
          %v987 = vrot.slane %v968, %v986
          %v988 = vsub.f32 %v811, %v987
          %v989 = vsub.f32 %v814, %v987
          %v990 = vsub.f32 %v817, %v987
          %v991 = vmul.f32 %v988, 2e-06
          %v992 = vmul.f32 %v989, 2e-06
          %v993 = vmul.f32 %v990, 2e-06
          %v994 = vadd.f32 %v949, %v991
          %v995 = vadd.f32 %v950, %v992
          %v996 = vadd.f32 %v951, %v993
          %v997 = vadd.f32 %v994, 1.9e-11
          %v998 = vadd.f32 %v995, 1.9e-11
          %v999 = vadd.f32 %v996, 1.9e-11
          %v1000 = vmax.f32 %v997, 0.0
          %v1001 = vmax.f32 %v998, 0.0
          %v1002 = vmax.f32 %v999, 0.0
          %v1003 = vrsqrt.pop %v1000
          %v1004 = vmul.f32 %v1000, %v1003
          %vm1005 = vcmp.eq.f32.partialorder %v1000, inf
          %v1006 = vsel %vm1005, %v1000, %v1004
          %vm1007 = vcmp.eq.f32.partialorder %v1000, 0.0
          %v1008 = vand.u32 %v1000, 2147483648
          %v1009 = vsel %vm1007, %v1008, %v1006
          %v1010 = vrsqrt.pop %v1001
          %v1011 = vmul.f32 %v1001, %v1010
          %vm1012 = vcmp.eq.f32.partialorder %v1001, inf
          %v1013 = vsel %vm1012, %v1001, %v1011
          %vm1014 = vcmp.eq.f32.partialorder %v1001, 0.0
          %v1015 = vand.u32 %v1001, 2147483648
          %v1016 = vsel %vm1014, %v1015, %v1013
          %v1017 = vrsqrt.pop %v1002
          %v1018 = vmul.f32 %v1002, %v1017
          %vm1019 = vcmp.eq.f32.partialorder %v1002, inf
          %v1020 = vsel %vm1019, %v1002, %v1018
          %vm1021 = vcmp.eq.f32.partialorder %v1002, 0.0
          %v1022 = vand.u32 %v1002, 2147483648
          %v1023 = vsel %vm1021, %v1022, %v1020
          %v1024 = vsub.f32 %v1009, %v782
          %v1025 = vsub.f32 %v1016, %v789
          %v1026 = vsub.f32 %v1023, %v796
          %v1027 = vlaneseq
          %v1028 = vand.u32 %v1027, 127
          %vm1029 = vcmp.lt.s32.totalorder %v296, %v1028
          %vm1030 = vcmp.lt.s32.totalorder %v297, %v1028
          %vm1031 = vcmp.lt.s32.totalorder %v298, %v1028
          %v1032 = vsel %vm1029, 1, 0
          %v1033 = vsel %vm1030, 1, 0
          %v1034 = vsel %vm1031, 1, 0
          %v1035 = vcvt.s32.f32 %v1032
          %v1036 = vcvt.s32.f32 %v1033
          %v1037 = vcvt.s32.f32 %v1034
          %v1038 = vmul.f32 %v1035, %v1024
          %v1039 = vmul.f32 %v1036, %v1025
          %v1040 = vmul.f32 %v1037, %v1026
          %v1041 = vmul.f32 %v1038, %v1024
          %v1042 = vmul.f32 %v1039, %v1025
          %v1043 = vmul.f32 %v1040, %v1026
          %v1044 = vsel %vm434, %v1041, 0.0
          %v1045 = vsel %vm434, %v1042, 0.0
          %v1046 = vadd.f32 %v1044, %v1045
          %v1047 = vsel %vm437, %v1043, 0.0
          %v1048 = vadd.f32 %v1046, %v1047
          %1049 = vadd.xlane.f32.xlu0 %v1048
          %v1050 = vpop.xlane.xlu0 %1049
          %v1051 = vrot.slane %v1050, 4
          %v1052 = vadd.f32 %v1050, %v1051
          %v1053 = vrot.slane %v1052, 2
          %v1054 = vadd.f32 %v1052, %v1053
          %v1055 = vrot.slane %v1054, 1
          %v1056 = vadd.f32 %v1054, %v1055
          %s1057 = vtos %v1056
          %s1058 = smul.f32 %s1057, 0.5
          %v1059 = vstv %s1058
          %1060 = vst [vmem:[%s235] sm:$0x1] %v1059
        $region40: #{tpu_custom_call.1} parent=31 // pred_fallthru
          _
        %s1061 = sand.u32 %s121, 1
        %s1062 = scalar_lea.sflag [#allocation6], %s1061
        %s1063 = sand.u32 %s121, 1
        %s1064 = scalar_lea.vmem [#allocation5], %s1063
        // Predicated region
        $region41: #{tpu_custom_call.1} parent=31 // pred_check
          %p1065 = pneg %p131
        $region42: #{tpu_custom_call.1} parent=31 // pred_check_branch
          %1067 = sbr.rel (%p1065) target = $region44
        $region43: #{tpu_custom_call.1} parent=31 // pred_region
          %s1069 = ssub.s32 16, 16
          %1070 = vsyncadd %s1062, %s1069
          %s1071 = smul.addr %s21, 16
          %s1072 = scalar_lea.hbm %s3, %s1071
          %s1074 = sshll.u32 %s1064, 4
          %s1075 = int_to_ptr.vmem [resolvable:$true] %s1074
          %1077 = dma.vmem_to_hbm [thread:$0]  %s1075, 16, %s1072, %s1062
        $region44: #{tpu_custom_call.1} parent=31 // pred_fallthru
          _
      $region32: #{tpu_custom_call.1} parent=5 // pred_fallthru
        _
      %p1078 = scmp.le.s32.totalorder 2, %s12
      // Predicated region
      $region45: #{tpu_custom_call.1} parent=5 // pred_check
        %p1079 = pneg %p1078
      $region46: #{tpu_custom_call.1} parent=5 // pred_check_branch
        %1081 = sbr.rel (%p1079) target = $region48
      $region47: #{tpu_custom_call.1} parent=5 // pred_region
        %s1082 = ssub.s32 %s12, 2
        // Predicated region
        $region49: #{tpu_custom_call.1} parent=47 // pred_check
          %p1083 = pneg %p137
        $region50: #{tpu_custom_call.1} parent=47 // pred_check_branch
          %1085 = sbr.rel (%p1083) target = $region52
        $region51: #{tpu_custom_call.1} parent=47 // pred_region
          %s1086 = sand.u32 %s122, 1
          %s1087 = scalar_lea.sflag [#allocation6], %s1086
          %s1088 = sand.u32 %s122, 1
          %s1089 = scalar_lea.vmem [#allocation5], %s1088
          %1090 = dma.done %s1087, 16
        $region52: #{tpu_custom_call.1} parent=47 // pred_fallthru
          _
      $region48: #{tpu_custom_call.1} parent=5 // pred_fallthru
        _
    $region6: #{tpu_custom_call.1} parent=1 // loop_footer
      %s16 = sadd.s32 1, %s12
    $region7: #{tpu_custom_call.1} parent=1 // loop_footer_branch
      %11 = sbr.rel target = $region3
    $region8: #{tpu_custom_call.1} parent=1 // loop_exit
      _
    %1091 = vsyncpa [#allocation6], 1
    %s1092 = scalar_lea.sflag [#allocation6], 1
    %1093 = vsyncpa %s1092, 1

</llo_original>
